<compile_context>
chip_gen: v5e
topology: v5e:2x2
jax: 0.10.0
libtpu: 0.0.40
codegen_flags: <defaults>
</compile_context>

<pallas_src>
import functools

import jax
import jax.numpy as jnp
from jax.experimental import pallas as pl
from jax.experimental.pallas import tpu as pltpu


def _round_up(x, m):
    return ((x + m - 1) // m) * m


def _cdiv(a, b):
    return -(-a // b)


def _num_tensorcores():
    """Best-effort TensorCore count per chip (2 on v7x, 1 on v5e/v6e)."""
    n = 1
    try:
        info = pltpu.get_tpu_info()
        for name in ("num_cores", "core_count", "tensorcore_count", "num_tensorcores"):
            v = getattr(info, name, None)
            if isinstance(v, int) and v > 0:
                n = v
                break
    except Exception:
        pass
    if n == 1:
        try:
            kind = jax.devices()[0].device_kind.lower()
            if "v7" in kind:
                n = 2
        except Exception:
            pass
    return n


def smooth_topk_gate_kernel(s_ref, g_ref, *, k, tau, max_iter, tol, chunk):
    s = s_ref[...].astype(jnp.float32)          # (S, TB): features on sublanes, batch on lanes
    S, TB = s.shape
    half_inv_tau = jnp.float32(0.5 / tau)
    four_tau = jnp.float32(4.0 * tau)
    kf = jnp.float32(k)
    Sf = jnp.float32(S)
    c_f = jnp.float32(0.5 * S - k)              # sum(sig)-k == 0.5*sum(t) + c_f
    tolf = jnp.float32(tol)
    eps = jnp.float32(4e-6)                     # clamp on (S - sum t^2) == 4*sum sig*(1-sig)

    # ---- theta0 = (k+1)-th largest per batch column (== sorted_s[:, -k-1]).
    # Pairwise rank with lower-index tie-break: exactly one element per column
    # has rank == k.  S-1 sublane rolls (XLU slot) + VPU compares; no serial
    # max-extraction chain.
    row = jax.lax.broadcasted_iota(jnp.int32, (S, TB), 0)
    rank = jnp.zeros_like(s)
    for d in range(1, S):
        sd = pltpu.roll(s, shift=d, axis=0)     # partner value s_{(i-d) mod S}
        gt = (sd > s).astype(jnp.float32)
        tie = jnp.logical_and(sd == s, row >= d).astype(jnp.float32)
        rank = rank + gt + tie
    theta0 = jnp.sum(jnp.where(rank == kf, s, jnp.float32(0.0)),
                     axis=0, keepdims=True)     # (1, TB)

    # ---- Newton iterations, chunked while_loop with exact break-before-update
    # semantics via a sticky vector `done` mask (scalar branch once per chunk).
    def newton_step(done, theta, _t):
        t = jnp.tanh((s - theta) * half_inv_tau)                  # single EUP op / elem
        f = 0.5 * jnp.sum(t, axis=0, keepdims=True) + c_f         # (1, TB) = sum(sig)-k
        # reference: `if mean(f) < tol: break` (signed mean, per tile) -- sticky.
        done = jnp.logical_or(done, jnp.mean(f) < tolf)
        denom = jnp.maximum(Sf - jnp.sum(t * t, axis=0, keepdims=True), eps)
        theta_new = theta + (four_tau * f) * pl.reciprocal(denom, approx=True)
        theta = jnp.where(done, theta, theta_new)                 # no update on/after break
        return done, theta, t

    def cond(carry):
        it, done, _, _ = carry
        return jnp.logical_and(jnp.logical_not(done), it < max_iter)

    def body(carry):
        it, done, theta, t = carry
        for _ in range(chunk):                                    # straight-line chunk
            done, theta, t = newton_step(done, theta, t)
        return it + chunk, done, theta, t

    _, done, theta, t = jax.lax.while_loop(
        cond, body, (jnp.int32(0), jnp.bool_(False), theta0, jnp.zeros_like(s)))

    # ---- final gate
    @pl.when(done)
    def _():
        # theta was not updated after the breaking iteration: the carried t is
        # already tanh((s - theta_final)/(2*tau)) -> gate is one VPU pass.
        g_ref[...] = (0.5 * (t + 1.0)).astype(g_ref.dtype)

    @pl.when(jnp.logical_not(done))
    def _():
        # exited via max_iter: theta was updated after the last carried t.
        tt = jnp.tanh((s - theta) * half_inv_tau)
        g_ref[...] = (0.5 * (tt + 1.0)).astype(g_ref.dtype)


@functools.partial(jax.jit,
                   static_argnames=("k", "tau", "max_iter", "tol", "block_b"))
def smooth_topk_gate(s, k=2, tau=0.01, max_iter=100, tol=1e-3, block_b=8192):
    """SmoothTopKGate forward.  s: (batch, s_dim) float32 -> g: (batch, s_dim)."""
    B, S = s.shape
    blk = _round_up(max(int(block_b), 128), 128)
    B128 = _round_up(B, 128)

    # Number of batch tiles: enough to respect the VMEM cap, and at least one
    # per TensorCore (when the batch allows) so "parallel" shards across cores.
    blocks = _cdiv(B128, blk)
    blocks = max(blocks, min(_num_tensorcores(), B128 // 128))
    tb = _round_up(_cdiv(B128, blocks), 128)    # lane-dense tile (multiple of 128)
    Bp = blocks * tb

    if Bp != B:
        # replicate the last real row so padded lanes behave like real ones
        s = jnp.pad(s, ((0, Bp - B), (0, 0)), mode="edge")
    sT = jnp.transpose(s)                       # (S, Bp): batch on the lane axis

    chunk = 4 if max_iter % 4 == 0 else (2 if max_iter % 2 == 0 else 1)
    kernel = functools.partial(
        smooth_topk_gate_kernel, k=k, tau=tau, max_iter=max_iter, tol=tol,
        chunk=chunk)

    exp_iters = 12                              # typical Newton convergence
    cost = pl.CostEstimate(
        flops=int(Bp * S * (10 * exp_iters + 6 * S)),
        transcendentals=int(Bp * S * (exp_iters + 1)),
        bytes_accessed=int(8 * Bp * S),
    )

    gT = pl.pallas_call(
        kernel,
        out_shape=jax.ShapeDtypeStruct((S, Bp), jnp.float32),
        grid=(blocks,),
        in_specs=[pl.BlockSpec((S, tb), lambda i: (0, i))],
        out_specs=pl.BlockSpec((S, tb), lambda i: (0, i)),
        compiler_params=pltpu.CompilerParams(
            dimension_semantics=("parallel",)),
        cost_estimate=cost,
    )(sT)
    return jnp.transpose(gT)[:B]


if __name__ == "__main__":
    # Shapes consistent with the module: batch_size=300, s_dim=8, k=2, tau=0.01.
    key = jax.random.PRNGKey(0)
    batch, s_dim = 300, 8
    s = jax.random.normal(key, (batch, s_dim), dtype=jnp.float32)

    g = smooth_topk_gate(s, k=2, tau=0.01)
    g = jax.block_until_ready(g)

    assert g.shape == (batch, s_dim) and g.dtype == jnp.float32
    assert bool(jnp.all(jnp.isfinite(g)))
    assert bool(jnp.all((g >= 0.0) & (g <= 1.0)))
    # Converged gates should sum to ~k per row on (batch-)average.
    mean_sum = float(jnp.mean(jnp.sum(g, axis=-1)))
    assert abs(mean_sum - 2.0) < 0.3, mean_sum
    print("KERNEL_OK")
</pallas_src>

<mosaic_0001>
module attributes {stable_mosaic.version = 11 : i64} {
  func.func @smooth_topk_gate_kernel(%arg0: i32, %arg1: memref<8x384xf32, #tpu.memory_space<vmem>>, %arg2: memref<8x384xf32, #tpu.memory_space<vmem>>) attributes {dimension_semantics = [#tpu.dimension_semantics<parallel>], iteration_bounds = array<i64: 1>, scalar_prefetch = 0 : i64, scratch_operands = 0 : i64, tpu.core_type = #tpu.core_type<tc>, window_params = [{transform_indices = @transform_0, window_bounds = array<i64: 8, 384>}, {transform_indices = @transform_1, window_bounds = array<i64: 8, 384>}]} {
    %c0 = arith.constant 0 : index
    %c0_0 = arith.constant 0 : index
    %0 = vector.load %arg1[%c0, %c0_0] : memref<8x384xf32, #tpu.memory_space<vmem>>, vector<8x384xf32>
    %1 = tpu.iota {dimensions = array<i32: 0>} : vector<8x384xi32>
    %cst = arith.constant 0.000000e+00 : f32
    %2 = vector.broadcast %cst : f32 to vector<8x384xf32>
    %c1_i32 = arith.constant 1 : i32
    %3 = tpu.dynamic_rotate %0 by %c1_i32 dim 0 : vector<8x384xf32>, i32 -> vector<8x384xf32>
    %4 = arith.cmpf ogt, %3, %0 : vector<8x384xf32>
    %5 = arith.extui %4 : vector<8x384xi1> to vector<8x384xi32>
    %6 = arith.sitofp %5 : vector<8x384xi32> to vector<8x384xf32>
    %7 = arith.cmpf oeq, %3, %0 : vector<8x384xf32>
    %c1_i32_1 = arith.constant 1 : i32
    %8 = vector.broadcast %c1_i32_1 : i32 to vector<8x384xi32>
    %9 = arith.cmpi sge, %1, %8 : vector<8x384xi32>
    %10 = arith.andi %7, %9 : vector<8x384xi1>
    %11 = arith.extui %10 : vector<8x384xi1> to vector<8x384xi32>
    %12 = arith.sitofp %11 : vector<8x384xi32> to vector<8x384xf32>
    %13 = arith.addf %2, %6 : vector<8x384xf32>
    %14 = arith.addf %13, %12 : vector<8x384xf32>
    %c2_i32 = arith.constant 2 : i32
    %15 = tpu.dynamic_rotate %0 by %c2_i32 dim 0 : vector<8x384xf32>, i32 -> vector<8x384xf32>
    %16 = arith.cmpf ogt, %15, %0 : vector<8x384xf32>
    %17 = arith.extui %16 : vector<8x384xi1> to vector<8x384xi32>
    %18 = arith.sitofp %17 : vector<8x384xi32> to vector<8x384xf32>
    %19 = arith.cmpf oeq, %15, %0 : vector<8x384xf32>
    %c2_i32_2 = arith.constant 2 : i32
    %20 = vector.broadcast %c2_i32_2 : i32 to vector<8x384xi32>
    %21 = arith.cmpi sge, %1, %20 : vector<8x384xi32>
    %22 = arith.andi %19, %21 : vector<8x384xi1>
    %23 = arith.extui %22 : vector<8x384xi1> to vector<8x384xi32>
    %24 = arith.sitofp %23 : vector<8x384xi32> to vector<8x384xf32>
    %25 = arith.addf %14, %18 : vector<8x384xf32>
    %26 = arith.addf %25, %24 : vector<8x384xf32>
    %c3_i32 = arith.constant 3 : i32
    %27 = tpu.dynamic_rotate %0 by %c3_i32 dim 0 : vector<8x384xf32>, i32 -> vector<8x384xf32>
    %28 = arith.cmpf ogt, %27, %0 : vector<8x384xf32>
    %29 = arith.extui %28 : vector<8x384xi1> to vector<8x384xi32>
    %30 = arith.sitofp %29 : vector<8x384xi32> to vector<8x384xf32>
    %31 = arith.cmpf oeq, %27, %0 : vector<8x384xf32>
    %c3_i32_3 = arith.constant 3 : i32
    %32 = vector.broadcast %c3_i32_3 : i32 to vector<8x384xi32>
    %33 = arith.cmpi sge, %1, %32 : vector<8x384xi32>
    %34 = arith.andi %31, %33 : vector<8x384xi1>
    %35 = arith.extui %34 : vector<8x384xi1> to vector<8x384xi32>
    %36 = arith.sitofp %35 : vector<8x384xi32> to vector<8x384xf32>
    %37 = arith.addf %26, %30 : vector<8x384xf32>
    %38 = arith.addf %37, %36 : vector<8x384xf32>
    %c4_i32 = arith.constant 4 : i32
    %39 = tpu.dynamic_rotate %0 by %c4_i32 dim 0 : vector<8x384xf32>, i32 -> vector<8x384xf32>
    %40 = arith.cmpf ogt, %39, %0 : vector<8x384xf32>
    %41 = arith.extui %40 : vector<8x384xi1> to vector<8x384xi32>
    %42 = arith.sitofp %41 : vector<8x384xi32> to vector<8x384xf32>
    %43 = arith.cmpf oeq, %39, %0 : vector<8x384xf32>
    %c4_i32_4 = arith.constant 4 : i32
    %44 = vector.broadcast %c4_i32_4 : i32 to vector<8x384xi32>
    %45 = arith.cmpi sge, %1, %44 : vector<8x384xi32>
    %46 = arith.andi %43, %45 : vector<8x384xi1>
    %47 = arith.extui %46 : vector<8x384xi1> to vector<8x384xi32>
    %48 = arith.sitofp %47 : vector<8x384xi32> to vector<8x384xf32>
    %49 = arith.addf %38, %42 : vector<8x384xf32>
    %50 = arith.addf %49, %48 : vector<8x384xf32>
    %c5_i32 = arith.constant 5 : i32
    %51 = tpu.dynamic_rotate %0 by %c5_i32 dim 0 : vector<8x384xf32>, i32 -> vector<8x384xf32>
    %52 = arith.cmpf ogt, %51, %0 : vector<8x384xf32>
    %53 = arith.extui %52 : vector<8x384xi1> to vector<8x384xi32>
    %54 = arith.sitofp %53 : vector<8x384xi32> to vector<8x384xf32>
    %55 = arith.cmpf oeq, %51, %0 : vector<8x384xf32>
    %c5_i32_5 = arith.constant 5 : i32
    %56 = vector.broadcast %c5_i32_5 : i32 to vector<8x384xi32>
    %57 = arith.cmpi sge, %1, %56 : vector<8x384xi32>
    %58 = arith.andi %55, %57 : vector<8x384xi1>
    %59 = arith.extui %58 : vector<8x384xi1> to vector<8x384xi32>
    %60 = arith.sitofp %59 : vector<8x384xi32> to vector<8x384xf32>
    %61 = arith.addf %50, %54 : vector<8x384xf32>
    %62 = arith.addf %61, %60 : vector<8x384xf32>
    %c6_i32 = arith.constant 6 : i32
    %63 = tpu.dynamic_rotate %0 by %c6_i32 dim 0 : vector<8x384xf32>, i32 -> vector<8x384xf32>
    %64 = arith.cmpf ogt, %63, %0 : vector<8x384xf32>
    %65 = arith.extui %64 : vector<8x384xi1> to vector<8x384xi32>
    %66 = arith.sitofp %65 : vector<8x384xi32> to vector<8x384xf32>
    %67 = arith.cmpf oeq, %63, %0 : vector<8x384xf32>
    %c6_i32_6 = arith.constant 6 : i32
    %68 = vector.broadcast %c6_i32_6 : i32 to vector<8x384xi32>
    %69 = arith.cmpi sge, %1, %68 : vector<8x384xi32>
    %70 = arith.andi %67, %69 : vector<8x384xi1>
    %71 = arith.extui %70 : vector<8x384xi1> to vector<8x384xi32>
    %72 = arith.sitofp %71 : vector<8x384xi32> to vector<8x384xf32>
    %73 = arith.addf %62, %66 : vector<8x384xf32>
    %74 = arith.addf %73, %72 : vector<8x384xf32>
    %c7_i32 = arith.constant 7 : i32
    %75 = tpu.dynamic_rotate %0 by %c7_i32 dim 0 : vector<8x384xf32>, i32 -> vector<8x384xf32>
    %76 = arith.cmpf ogt, %75, %0 : vector<8x384xf32>
    %77 = arith.extui %76 : vector<8x384xi1> to vector<8x384xi32>
    %78 = arith.sitofp %77 : vector<8x384xi32> to vector<8x384xf32>
    %79 = arith.cmpf oeq, %75, %0 : vector<8x384xf32>
    %c7_i32_7 = arith.constant 7 : i32
    %80 = vector.broadcast %c7_i32_7 : i32 to vector<8x384xi32>
    %81 = arith.cmpi sge, %1, %80 : vector<8x384xi32>
    %82 = arith.andi %79, %81 : vector<8x384xi1>
    %83 = arith.extui %82 : vector<8x384xi1> to vector<8x384xi32>
    %84 = arith.sitofp %83 : vector<8x384xi32> to vector<8x384xf32>
    %85 = arith.addf %74, %78 : vector<8x384xf32>
    %86 = arith.addf %85, %84 : vector<8x384xf32>
    %cst_8 = arith.constant 2.000000e+00 : f32
    %87 = vector.broadcast %cst_8 : f32 to vector<8x384xf32>
    %88 = arith.cmpf oeq, %86, %87 : vector<8x384xf32>
    %cst_9 = arith.constant 0.000000e+00 : f32
    %89 = vector.broadcast %cst_9 : f32 to vector<8x384xf32>
    %90 = arith.select %88, %0, %89 : vector<8x384xi1>, vector<8x384xf32>
    %cst_10 = arith.constant dense<0.000000e+00> : vector<384xf32>
    %91 = vector.multi_reduction <add>, %90, %cst_10 [0] : vector<8x384xf32> to vector<384xf32>
    %92 = vector.shape_cast %91 : vector<384xf32> to vector<1x384xf32>
    %cst_11 = arith.constant 0.000000e+00 : f32
    %93 = vector.broadcast %cst_11 : f32 to vector<8x384xf32>
    %cst_12 = arith.constant 5.000000e+01 : f32
    %cst_13 = arith.constant 2.000000e+00 : f32
    %cst_14 = arith.constant 1.000000e-03 : f32
    %cst_15 = arith.constant 8.000000e+00 : f32
    %cst_16 = arith.constant 4.000000e-06 : f32
    %cst_17 = arith.constant 4.000000e-02 : f32
    %c0_i32 = arith.constant 0 : i32
    %false = arith.constant false
    %94:4 = scf.while (%arg3 = %c0_i32, %arg4 = %false, %arg5 = %92, %arg6 = %93) : (i32, i1, vector<1x384xf32>, vector<8x384xf32>) -> (i32, i1, vector<1x384xf32>, vector<8x384xf32>) {
      %true_21 = arith.constant true
      %100 = arith.xori %arg4, %true_21 : i1
      %c100_i32 = arith.constant 100 : i32
      %101 = arith.cmpi slt, %arg3, %c100_i32 : i32
      %102 = arith.andi %100, %101 : i1
      scf.condition(%102) %arg3, %arg4, %arg5, %arg6 : i32, i1, vector<1x384xf32>, vector<8x384xf32>
    } do {
    ^bb0(%arg3: i32, %arg4: i1, %arg5: vector<1x384xf32>, %arg6: vector<8x384xf32>):
      %100 = vector.broadcast %arg5 : vector<1x384xf32> to vector<8x384xf32>
      %101 = arith.subf %0, %100 : vector<8x384xf32>
      %102 = vector.broadcast %cst_12 : f32 to vector<8x384xf32>
      %103 = arith.mulf %101, %102 : vector<8x384xf32>
      %104 = math.tanh %103 : vector<8x384xf32>
      %cst_21 = arith.constant dense<0.000000e+00> : vector<384xf32>
      %105 = vector.multi_reduction <add>, %104, %cst_21 [0] : vector<8x384xf32> to vector<384xf32>
      %106 = vector.shape_cast %105 : vector<384xf32> to vector<1x384xf32>
      %cst_22 = arith.constant 5.000000e-01 : f32
      %107 = vector.broadcast %cst_22 : f32 to vector<1x384xf32>
      %108 = arith.mulf %107, %106 : vector<1x384xf32>
      %109 = vector.broadcast %cst_13 : f32 to vector<1x384xf32>
      %110 = arith.addf %108, %109 : vector<1x384xf32>
      %111 = vector.shape_cast %110 : vector<1x384xf32> to vector<1x1x384xf32>
      %cst_23 = arith.constant dense<0.000000e+00> : vector<1xf32>
      %112 = vector.multi_reduction <add>, %111, %cst_23 [1, 2] : vector<1x1x384xf32> to vector<1xf32>
      %113 = vector.shape_cast %112 : vector<1xf32> to vector<1x1x1xf32>
      %114 = vector.extract %113[0, 0, 0] : f32 from vector<1x1x1xf32>
      %cst_24 = arith.constant 3.840000e+02 : f32
      %115 = arith.divf %114, %cst_24 : f32
      %116 = arith.cmpf olt, %115, %cst_14 : f32
      %117 = arith.ori %arg4, %116 : i1
      %118 = arith.mulf %104, %104 : vector<8x384xf32>
      %cst_25 = arith.constant dense<0.000000e+00> : vector<384xf32>
      %119 = vector.multi_reduction <add>, %118, %cst_25 [0] : vector<8x384xf32> to vector<384xf32>
      %120 = vector.shape_cast %119 : vector<384xf32> to vector<1x384xf32>
      %121 = vector.broadcast %cst_15 : f32 to vector<1x384xf32>
      %122 = arith.subf %121, %120 : vector<1x384xf32>
      %123 = vector.broadcast %cst_16 : f32 to vector<1x384xf32>
      %124 = arith.maximumf %122, %123 : vector<1x384xf32>
      %125 = vector.broadcast %cst_17 : f32 to vector<1x384xf32>
      %126 = arith.mulf %125, %110 : vector<1x384xf32>
      %127 = tpu.reciprocal %124 {approx = true} : vector<1x384xf32> -> vector<1x384xf32>
      %128 = arith.mulf %126, %127 : vector<1x384xf32>
      %129 = arith.addf %arg5, %128 : vector<1x384xf32>
      %130 = arith.select %117, %arg5, %129 : vector<1x384xf32>
      %131 = vector.broadcast %130 : vector<1x384xf32> to vector<8x384xf32>
      %132 = arith.subf %0, %131 : vector<8x384xf32>
      %133 = vector.broadcast %cst_12 : f32 to vector<8x384xf32>
      %134 = arith.mulf %132, %133 : vector<8x384xf32>
      %135 = math.tanh %134 : vector<8x384xf32>
      %cst_26 = arith.constant dense<0.000000e+00> : vector<384xf32>
      %136 = vector.multi_reduction <add>, %135, %cst_26 [0] : vector<8x384xf32> to vector<384xf32>
      %137 = vector.shape_cast %136 : vector<384xf32> to vector<1x384xf32>
      %cst_27 = arith.constant 5.000000e-01 : f32
      %138 = vector.broadcast %cst_27 : f32 to vector<1x384xf32>
      %139 = arith.mulf %138, %137 : vector<1x384xf32>
      %140 = vector.broadcast %cst_13 : f32 to vector<1x384xf32>
      %141 = arith.addf %139, %140 : vector<1x384xf32>
      %142 = vector.shape_cast %141 : vector<1x384xf32> to vector<1x1x384xf32>
      %cst_28 = arith.constant dense<0.000000e+00> : vector<1xf32>
      %143 = vector.multi_reduction <add>, %142, %cst_28 [1, 2] : vector<1x1x384xf32> to vector<1xf32>
      %144 = vector.shape_cast %143 : vector<1xf32> to vector<1x1x1xf32>
      %145 = vector.extract %144[0, 0, 0] : f32 from vector<1x1x1xf32>
      %cst_29 = arith.constant 3.840000e+02 : f32
      %146 = arith.divf %145, %cst_29 : f32
      %147 = arith.cmpf olt, %146, %cst_14 : f32
      %148 = arith.ori %117, %147 : i1
      %149 = arith.mulf %135, %135 : vector<8x384xf32>
      %cst_30 = arith.constant dense<0.000000e+00> : vector<384xf32>
      %150 = vector.multi_reduction <add>, %149, %cst_30 [0] : vector<8x384xf32> to vector<384xf32>
      %151 = vector.shape_cast %150 : vector<384xf32> to vector<1x384xf32>
      %152 = vector.broadcast %cst_15 : f32 to vector<1x384xf32>
      %153 = arith.subf %152, %151 : vector<1x384xf32>
      %154 = vector.broadcast %cst_16 : f32 to vector<1x384xf32>
      %155 = arith.maximumf %153, %154 : vector<1x384xf32>
      %156 = vector.broadcast %cst_17 : f32 to vector<1x384xf32>
      %157 = arith.mulf %156, %141 : vector<1x384xf32>
      %158 = tpu.reciprocal %155 {approx = true} : vector<1x384xf32> -> vector<1x384xf32>
      %159 = arith.mulf %157, %158 : vector<1x384xf32>
      %160 = arith.addf %130, %159 : vector<1x384xf32>
      %161 = arith.select %148, %130, %160 : vector<1x384xf32>
      %162 = vector.broadcast %161 : vector<1x384xf32> to vector<8x384xf32>
      %163 = arith.subf %0, %162 : vector<8x384xf32>
      %164 = vector.broadcast %cst_12 : f32 to vector<8x384xf32>
      %165 = arith.mulf %163, %164 : vector<8x384xf32>
      %166 = math.tanh %165 : vector<8x384xf32>
      %cst_31 = arith.constant dense<0.000000e+00> : vector<384xf32>
      %167 = vector.multi_reduction <add>, %166, %cst_31 [0] : vector<8x384xf32> to vector<384xf32>
      %168 = vector.shape_cast %167 : vector<384xf32> to vector<1x384xf32>
      %cst_32 = arith.constant 5.000000e-01 : f32
      %169 = vector.broadcast %cst_32 : f32 to vector<1x384xf32>
      %170 = arith.mulf %169, %168 : vector<1x384xf32>
      %171 = vector.broadcast %cst_13 : f32 to vector<1x384xf32>
      %172 = arith.addf %170, %171 : vector<1x384xf32>
      %173 = vector.shape_cast %172 : vector<1x384xf32> to vector<1x1x384xf32>
      %cst_33 = arith.constant dense<0.000000e+00> : vector<1xf32>
      %174 = vector.multi_reduction <add>, %173, %cst_33 [1, 2] : vector<1x1x384xf32> to vector<1xf32>
      %175 = vector.shape_cast %174 : vector<1xf32> to vector<1x1x1xf32>
      %176 = vector.extract %175[0, 0, 0] : f32 from vector<1x1x1xf32>
      %cst_34 = arith.constant 3.840000e+02 : f32
      %177 = arith.divf %176, %cst_34 : f32
      %178 = arith.cmpf olt, %177, %cst_14 : f32
      %179 = arith.ori %148, %178 : i1
      %180 = arith.mulf %166, %166 : vector<8x384xf32>
      %cst_35 = arith.constant dense<0.000000e+00> : vector<384xf32>
      %181 = vector.multi_reduction <add>, %180, %cst_35 [0] : vector<8x384xf32> to vector<384xf32>
      %182 = vector.shape_cast %181 : vector<384xf32> to vector<1x384xf32>
      %183 = vector.broadcast %cst_15 : f32 to vector<1x384xf32>
      %184 = arith.subf %183, %182 : vector<1x384xf32>
      %185 = vector.broadcast %cst_16 : f32 to vector<1x384xf32>
      %186 = arith.maximumf %184, %185 : vector<1x384xf32>
      %187 = vector.broadcast %cst_17 : f32 to vector<1x384xf32>
      %188 = arith.mulf %187, %172 : vector<1x384xf32>
      %189 = tpu.reciprocal %186 {approx = true} : vector<1x384xf32> -> vector<1x384xf32>
      %190 = arith.mulf %188, %189 : vector<1x384xf32>
      %191 = arith.addf %161, %190 : vector<1x384xf32>
      %192 = arith.select %179, %161, %191 : vector<1x384xf32>
      %193 = vector.broadcast %192 : vector<1x384xf32> to vector<8x384xf32>
      %194 = arith.subf %0, %193 : vector<8x384xf32>
      %195 = vector.broadcast %cst_12 : f32 to vector<8x384xf32>
      %196 = arith.mulf %194, %195 : vector<8x384xf32>
      %197 = math.tanh %196 : vector<8x384xf32>
      %cst_36 = arith.constant dense<0.000000e+00> : vector<384xf32>
      %198 = vector.multi_reduction <add>, %197, %cst_36 [0] : vector<8x384xf32> to vector<384xf32>
      %199 = vector.shape_cast %198 : vector<384xf32> to vector<1x384xf32>
      %cst_37 = arith.constant 5.000000e-01 : f32
      %200 = vector.broadcast %cst_37 : f32 to vector<1x384xf32>
      %201 = arith.mulf %200, %199 : vector<1x384xf32>
      %202 = vector.broadcast %cst_13 : f32 to vector<1x384xf32>
      %203 = arith.addf %201, %202 : vector<1x384xf32>
      %204 = vector.shape_cast %203 : vector<1x384xf32> to vector<1x1x384xf32>
      %cst_38 = arith.constant dense<0.000000e+00> : vector<1xf32>
      %205 = vector.multi_reduction <add>, %204, %cst_38 [1, 2] : vector<1x1x384xf32> to vector<1xf32>
      %206 = vector.shape_cast %205 : vector<1xf32> to vector<1x1x1xf32>
      %207 = vector.extract %206[0, 0, 0] : f32 from vector<1x1x1xf32>
      %cst_39 = arith.constant 3.840000e+02 : f32
      %208 = arith.divf %207, %cst_39 : f32
      %209 = arith.cmpf olt, %208, %cst_14 : f32
      %210 = arith.ori %179, %209 : i1
      %211 = arith.mulf %197, %197 : vector<8x384xf32>
      %cst_40 = arith.constant dense<0.000000e+00> : vector<384xf32>
      %212 = vector.multi_reduction <add>, %211, %cst_40 [0] : vector<8x384xf32> to vector<384xf32>
      %213 = vector.shape_cast %212 : vector<384xf32> to vector<1x384xf32>
      %214 = vector.broadcast %cst_15 : f32 to vector<1x384xf32>
      %215 = arith.subf %214, %213 : vector<1x384xf32>
      %216 = vector.broadcast %cst_16 : f32 to vector<1x384xf32>
      %217 = arith.maximumf %215, %216 : vector<1x384xf32>
      %218 = vector.broadcast %cst_17 : f32 to vector<1x384xf32>
      %219 = arith.mulf %218, %203 : vector<1x384xf32>
      %220 = tpu.reciprocal %217 {approx = true} : vector<1x384xf32> -> vector<1x384xf32>
      %221 = arith.mulf %219, %220 : vector<1x384xf32>
      %222 = arith.addf %192, %221 : vector<1x384xf32>
      %223 = arith.select %210, %192, %222 : vector<1x384xf32>
      %c4_i32_41 = arith.constant 4 : i32
      %224 = arith.addi %arg3, %c4_i32_41 : i32
      scf.yield %224, %210, %223, %197 : i32, i1, vector<1x384xf32>, vector<8x384xf32>
    }
    %95 = arith.extui %94#1 : i1 to i32
    %c0_i32_18 = arith.constant 0 : i32
    %96 = arith.cmpi ne, %95, %c0_i32_18 : i32
    scf.if %96 {
      %cst_21 = arith.constant 1.000000e+00 : f32
      %100 = vector.broadcast %cst_21 : f32 to vector<8x384xf32>
      %101 = arith.addf %94#3, %100 : vector<8x384xf32>
      %cst_22 = arith.constant 5.000000e-01 : f32
      %102 = vector.broadcast %cst_22 : f32 to vector<8x384xf32>
      %103 = arith.mulf %102, %101 : vector<8x384xf32>
      %c0_23 = arith.constant 0 : index
      %c0_24 = arith.constant 0 : index
      %104 = vector.load %arg2[%c0_23, %c0_24] : memref<8x384xf32, #tpu.memory_space<vmem>>, vector<8x384xf32>
      tpu.vector_store %arg2[%c0_23, %c0_24], %103 {strides = array<i32>} : memref<8x384xf32, #tpu.memory_space<vmem>>, vector<8x384xf32>,
    } else {
    }
    %true = arith.constant true
    %97 = arith.xori %94#1, %true : i1
    %98 = arith.extui %97 : i1 to i32
    %cst_19 = arith.constant 5.000000e+01 : f32
    %c0_i32_20 = arith.constant 0 : i32
    %99 = arith.cmpi ne, %98, %c0_i32_20 : i32
    scf.if %99 {
      %100 = vector.broadcast %94#2 : vector<1x384xf32> to vector<8x384xf32>
      %101 = arith.subf %0, %100 : vector<8x384xf32>
      %102 = vector.broadcast %cst_19 : f32 to vector<8x384xf32>
      %103 = arith.mulf %101, %102 : vector<8x384xf32>
      %104 = math.tanh %103 : vector<8x384xf32>
      %cst_21 = arith.constant 1.000000e+00 : f32
      %105 = vector.broadcast %cst_21 : f32 to vector<8x384xf32>
      %106 = arith.addf %104, %105 : vector<8x384xf32>
      %cst_22 = arith.constant 5.000000e-01 : f32
      %107 = vector.broadcast %cst_22 : f32 to vector<8x384xf32>
      %108 = arith.mulf %107, %106 : vector<8x384xf32>
      %c0_23 = arith.constant 0 : index
      %c0_24 = arith.constant 0 : index
      %109 = vector.load %arg2[%c0_23, %c0_24] : memref<8x384xf32, #tpu.memory_space<vmem>>, vector<8x384xf32>
      tpu.vector_store %arg2[%c0_23, %c0_24], %108 {strides = array<i32>} : memref<8x384xf32, #tpu.memory_space<vmem>>, vector<8x384xf32>,
    } else {
    }
    return
  }
  func.func @transform_0(%arg0: i32) -> (i32, i32) {
    %c0_i32 = arith.constant 0 : i32
    %c0_i32_0 = arith.constant 0 : i32
    return %c0_i32, %arg0 : i32, i32
  }
  func.func @transform_1(%arg0: i32) -> (i32, i32) {
    %c0_i32 = arith.constant 0 : i32
    %c0_i32_0 = arith.constant 0 : i32
    return %c0_i32, %arg0 : i32, i32
  }
}

</mosaic_0001>

<llo_original>
// kernel: smooth_topk_gate.1
$region0: #{smooth_topk_gate.1}
  #allocation0 [shape = 'u32[]', space=smem, size = 0x4, offset = 0x4, fixed_abs, tag = 'smem constant byte address 0x4 - core index']
  #allocation1 [shape = 'u32[72,128]{1,0:T(1,128)}', space=vmem, size = 0x9000, scoped, tag = 'internal scratch']
  %s0 = inlined_call_operand.vmem [shape: f32[8,384], index: 0, kind: input, shape index: {}]
  %s1 = inlined_call_operand.hbm [shape: f32[8,384], index: 1, kind: output, shape index: {}]
  %s2 = sld [smem:[#allocation0]]
  $region29: #{smooth_topk_gate.1} parent=0
    _
  %s4 = ssub.s32 1, %s2
  %s5 = scalar_select 0, %s4, %s2
  $region1: #{smooth_topk_gate.1} parent=0
    #allocation2 [shape = 'u8[12288]{0}', space=vmem, size = 0x3000, scoped, tag = 'output window, operand 0, single buffered']
    #allocation3 [shape = 's32[1]{0}', space=sflag, size = 0x4, scoped, tag = 'scoped memory for smooth_topk_gate.1']
    %6 = vsyncpa [#allocation3], 0
    // Predicated region
    $region2: #{smooth_topk_gate.1} parent=1 // pred_check
      _
    $region3: #{smooth_topk_gate.1} parent=1 // pred_check_branch
      %8 = sbr.rel (0) target = $region5
    $region4: #{smooth_topk_gate.1} parent=1 // pred_region
      _
    $region5: #{smooth_topk_gate.1} parent=1 // pred_fallthru
      _
    %v9 = vld [vmem:[%s0] sm:$0xff]
    %v10 = vld [vmem:[%s0 + $0x8] sm:$0xff]
    %v11 = vld [vmem:[%s0 + $0x10] sm:$0xff]
    %v12 = vlaneseq
    %v13 = vshrl.u32 %v12, 7
    %v14 = vrot.slane %v9, 7
    %v15 = vrot.slane %v10, 7
    %v16 = vrot.slane %v11, 7
    %vm17 = vcmp.gt.f32.partialorder %v14, %v9
    %vm18 = vcmp.gt.f32.partialorder %v15, %v10
    %vm19 = vcmp.gt.f32.partialorder %v16, %v11
    %v20 = vsel %vm17, 1, 0
    %v21 = vsel %vm18, 1, 0
    %v22 = vsel %vm19, 1, 0
    %v23 = vcvt.s32.f32 %v20
    %v24 = vcvt.s32.f32 %v21
    %v25 = vcvt.s32.f32 %v22
    %vm26 = vcmp.eq.f32.partialorder %v14, %v9
    %vm27 = vcmp.eq.f32.partialorder %v15, %v10
    %vm28 = vcmp.eq.f32.partialorder %v16, %v11
    %vm29 = vcmp.ge.s32.totalorder %v13, 1
    %vm30 = vmand %vm26, %vm29
    %vm31 = vmand %vm27, %vm29
    %vm32 = vmand %vm28, %vm29
    %v33 = vsel %vm30, 1, 0
    %v34 = vsel %vm31, 1, 0
    %v35 = vsel %vm32, 1, 0
    %v36 = vcvt.s32.f32 %v33
    %v37 = vcvt.s32.f32 %v34
    %v38 = vcvt.s32.f32 %v35
    %v39 = vadd.f32 %v23, 0.0
    %v40 = vadd.f32 %v24, 0.0
    %v41 = vadd.f32 %v25, 0.0
    %v42 = vadd.f32 %v39, %v36
    %v43 = vadd.f32 %v40, %v37
    %v44 = vadd.f32 %v41, %v38
    %v45 = vrot.slane %v9, 6
    %v46 = vrot.slane %v10, 6
    %v47 = vrot.slane %v11, 6
    %vm48 = vcmp.gt.f32.partialorder %v45, %v9
    %vm49 = vcmp.gt.f32.partialorder %v46, %v10
    %vm50 = vcmp.gt.f32.partialorder %v47, %v11
    %v51 = vsel %vm48, 1, 0
    %v52 = vsel %vm49, 1, 0
    %v53 = vsel %vm50, 1, 0
    %v54 = vcvt.s32.f32 %v51
    %v55 = vcvt.s32.f32 %v52
    %v56 = vcvt.s32.f32 %v53
    %vm57 = vcmp.eq.f32.partialorder %v45, %v9
    %vm58 = vcmp.eq.f32.partialorder %v46, %v10
    %vm59 = vcmp.eq.f32.partialorder %v47, %v11
    %vm60 = vcmp.ge.s32.totalorder %v13, 2
    %vm61 = vmand %vm57, %vm60
    %vm62 = vmand %vm58, %vm60
    %vm63 = vmand %vm59, %vm60
    %v64 = vsel %vm61, 1, 0
    %v65 = vsel %vm62, 1, 0
    %v66 = vsel %vm63, 1, 0
    %v67 = vcvt.s32.f32 %v64
    %v68 = vcvt.s32.f32 %v65
    %v69 = vcvt.s32.f32 %v66
    %v70 = vadd.f32 %v42, %v54
    %v71 = vadd.f32 %v43, %v55
    %v72 = vadd.f32 %v44, %v56
    %v73 = vadd.f32 %v70, %v67
    %v74 = vadd.f32 %v71, %v68
    %v75 = vadd.f32 %v72, %v69
    %v76 = vrot.slane %v9, 5
    %v77 = vrot.slane %v10, 5
    %v78 = vrot.slane %v11, 5
    %vm79 = vcmp.gt.f32.partialorder %v76, %v9
    %vm80 = vcmp.gt.f32.partialorder %v77, %v10
    %vm81 = vcmp.gt.f32.partialorder %v78, %v11
    %v82 = vsel %vm79, 1, 0
    %v83 = vsel %vm80, 1, 0
    %v84 = vsel %vm81, 1, 0
    %v85 = vcvt.s32.f32 %v82
    %v86 = vcvt.s32.f32 %v83
    %v87 = vcvt.s32.f32 %v84
    %vm88 = vcmp.eq.f32.partialorder %v76, %v9
    %vm89 = vcmp.eq.f32.partialorder %v77, %v10
    %vm90 = vcmp.eq.f32.partialorder %v78, %v11
    %vm91 = vcmp.ge.s32.totalorder %v13, 3
    %vm92 = vmand %vm88, %vm91
    %vm93 = vmand %vm89, %vm91
    %vm94 = vmand %vm90, %vm91
    %v95 = vsel %vm92, 1, 0
    %v96 = vsel %vm93, 1, 0
    %v97 = vsel %vm94, 1, 0
    %v98 = vcvt.s32.f32 %v95
    %v99 = vcvt.s32.f32 %v96
    %v100 = vcvt.s32.f32 %v97
    %v101 = vadd.f32 %v73, %v85
    %v102 = vadd.f32 %v74, %v86
    %v103 = vadd.f32 %v75, %v87
    %v104 = vadd.f32 %v101, %v98
    %v105 = vadd.f32 %v102, %v99
    %v106 = vadd.f32 %v103, %v100
    %v107 = vrot.slane %v9, 4
    %v108 = vrot.slane %v10, 4
    %v109 = vrot.slane %v11, 4
    %vm110 = vcmp.gt.f32.partialorder %v107, %v9
    %vm111 = vcmp.gt.f32.partialorder %v108, %v10
    %vm112 = vcmp.gt.f32.partialorder %v109, %v11
    %v113 = vsel %vm110, 1, 0
    %v114 = vsel %vm111, 1, 0
    %v115 = vsel %vm112, 1, 0
    %v116 = vcvt.s32.f32 %v113
    %v117 = vcvt.s32.f32 %v114
    %v118 = vcvt.s32.f32 %v115
    %vm119 = vcmp.eq.f32.partialorder %v107, %v9
    %vm120 = vcmp.eq.f32.partialorder %v108, %v10
    %vm121 = vcmp.eq.f32.partialorder %v109, %v11
    %vm122 = vcmp.ge.s32.totalorder %v13, 4
    %vm123 = vmand %vm119, %vm122
    %vm124 = vmand %vm120, %vm122
    %vm125 = vmand %vm121, %vm122
    %v126 = vsel %vm123, 1, 0
    %v127 = vsel %vm124, 1, 0
    %v128 = vsel %vm125, 1, 0
    %v129 = vcvt.s32.f32 %v126
    %v130 = vcvt.s32.f32 %v127
    %v131 = vcvt.s32.f32 %v128
    %v132 = vadd.f32 %v104, %v116
    %v133 = vadd.f32 %v105, %v117
    %v134 = vadd.f32 %v106, %v118
    %v135 = vadd.f32 %v132, %v129
    %v136 = vadd.f32 %v133, %v130
    %v137 = vadd.f32 %v134, %v131
    %v138 = vrot.slane %v9, 3
    %v139 = vrot.slane %v10, 3
    %v140 = vrot.slane %v11, 3
    %vm141 = vcmp.gt.f32.partialorder %v138, %v9
    %vm142 = vcmp.gt.f32.partialorder %v139, %v10
    %vm143 = vcmp.gt.f32.partialorder %v140, %v11
    %v144 = vsel %vm141, 1, 0
    %v145 = vsel %vm142, 1, 0
    %v146 = vsel %vm143, 1, 0
    %v147 = vcvt.s32.f32 %v144
    %v148 = vcvt.s32.f32 %v145
    %v149 = vcvt.s32.f32 %v146
    %vm150 = vcmp.eq.f32.partialorder %v138, %v9
    %vm151 = vcmp.eq.f32.partialorder %v139, %v10
    %vm152 = vcmp.eq.f32.partialorder %v140, %v11
    %vm153 = vcmp.ge.s32.totalorder %v13, 5
    %vm154 = vmand %vm150, %vm153
    %vm155 = vmand %vm151, %vm153
    %vm156 = vmand %vm152, %vm153
    %v157 = vsel %vm154, 1, 0
    %v158 = vsel %vm155, 1, 0
    %v159 = vsel %vm156, 1, 0
    %v160 = vcvt.s32.f32 %v157
    %v161 = vcvt.s32.f32 %v158
    %v162 = vcvt.s32.f32 %v159
    %v163 = vadd.f32 %v135, %v147
    %v164 = vadd.f32 %v136, %v148
    %v165 = vadd.f32 %v137, %v149
    %v166 = vadd.f32 %v163, %v160
    %v167 = vadd.f32 %v164, %v161
    %v168 = vadd.f32 %v165, %v162
    %v169 = vrot.slane %v9, 2
    %v170 = vrot.slane %v10, 2
    %v171 = vrot.slane %v11, 2
    %vm172 = vcmp.gt.f32.partialorder %v169, %v9
    %vm173 = vcmp.gt.f32.partialorder %v170, %v10
    %vm174 = vcmp.gt.f32.partialorder %v171, %v11
    %v175 = vsel %vm172, 1, 0
    %v176 = vsel %vm173, 1, 0
    %v177 = vsel %vm174, 1, 0
    %v178 = vcvt.s32.f32 %v175
    %v179 = vcvt.s32.f32 %v176
    %v180 = vcvt.s32.f32 %v177
    %vm181 = vcmp.eq.f32.partialorder %v169, %v9
    %vm182 = vcmp.eq.f32.partialorder %v170, %v10
    %vm183 = vcmp.eq.f32.partialorder %v171, %v11
    %vm184 = vcmp.ge.s32.totalorder %v13, 6
    %vm185 = vmand %vm181, %vm184
    %vm186 = vmand %vm182, %vm184
    %vm187 = vmand %vm183, %vm184
    %v188 = vsel %vm185, 1, 0
    %v189 = vsel %vm186, 1, 0
    %v190 = vsel %vm187, 1, 0
    %v191 = vcvt.s32.f32 %v188
    %v192 = vcvt.s32.f32 %v189
    %v193 = vcvt.s32.f32 %v190
    %v194 = vadd.f32 %v166, %v178
    %v195 = vadd.f32 %v167, %v179
    %v196 = vadd.f32 %v168, %v180
    %v197 = vadd.f32 %v194, %v191
    %v198 = vadd.f32 %v195, %v192
    %v199 = vadd.f32 %v196, %v193
    %v200 = vrot.slane %v9, 1
    %v201 = vrot.slane %v10, 1
    %v202 = vrot.slane %v11, 1
    %vm203 = vcmp.gt.f32.partialorder %v200, %v9
    %vm204 = vcmp.gt.f32.partialorder %v201, %v10
    %vm205 = vcmp.gt.f32.partialorder %v202, %v11
    %v206 = vsel %vm203, 1, 0
    %v207 = vsel %vm204, 1, 0
    %v208 = vsel %vm205, 1, 0
    %v209 = vcvt.s32.f32 %v206
    %v210 = vcvt.s32.f32 %v207
    %v211 = vcvt.s32.f32 %v208
    %vm212 = vcmp.eq.f32.partialorder %v200, %v9
    %vm213 = vcmp.eq.f32.partialorder %v201, %v10
    %vm214 = vcmp.eq.f32.partialorder %v202, %v11
    %vm215 = vcmp.ge.s32.totalorder %v13, 7
    %vm216 = vmand %vm212, %vm215
    %vm217 = vmand %vm213, %vm215
    %vm218 = vmand %vm214, %vm215
    %v219 = vsel %vm216, 1, 0
    %v220 = vsel %vm217, 1, 0
    %v221 = vsel %vm218, 1, 0
    %v222 = vcvt.s32.f32 %v219
    %v223 = vcvt.s32.f32 %v220
    %v224 = vcvt.s32.f32 %v221
    %v225 = vadd.f32 %v197, %v209
    %v226 = vadd.f32 %v198, %v210
    %v227 = vadd.f32 %v199, %v211
    %v228 = vadd.f32 %v225, %v222
    %v229 = vadd.f32 %v226, %v223
    %v230 = vadd.f32 %v227, %v224
    %vm231 = vcmp.eq.f32.partialorder %v228, 2.0
    %vm232 = vcmp.eq.f32.partialorder %v229, 2.0
    %vm233 = vcmp.eq.f32.partialorder %v230, 2.0
    %v234 = vsel %vm231, %v9, 0.0
    %v235 = vsel %vm232, %v10, 0.0
    %v236 = vsel %vm233, %v11, 0.0
    %v237 = vrot.slane %v234, 4
    %v238 = vadd.f32 %v234, %v237
    %v239 = vrot.slane %v238, 2
    %v240 = vadd.f32 %v238, %v239
    %v241 = vrot.slane %v240, 1
    %v242 = vadd.f32 %v240, %v241
    %v243 = vrot.slane %v235, 4
    %v244 = vadd.f32 %v235, %v243
    %v245 = vrot.slane %v244, 2
    %v246 = vadd.f32 %v244, %v245
    %v247 = vrot.slane %v246, 1
    %v248 = vadd.f32 %v246, %v247
    %v249 = vrot.slane %v236, 4
    %v250 = vadd.f32 %v236, %v249
    %v251 = vrot.slane %v250, 2
    %v252 = vadd.f32 %v250, %v251
    %v253 = vrot.slane %v252, 1
    %v254 = vadd.f32 %v252, %v253
    // While loop
    $region6: #{smooth_topk_gate.1} parent=1 // loop_pre_header
      _
    $region7: #{smooth_topk_gate.1} parent=1 // loop_header
      %s256 = sphi 0, %s683
      %p257 = pphi 0, %p637
      %v258 = vphi %v242, %v680
      %v259 = vphi %v248, %v681
      %v260 = vphi %v254, %v682
      %v261 = vphi 0.0, %v586
      %v262 = vphi 0.0, %v587
      %v263 = vphi 0.0, %v588
      %p264 = pneg %p257
      %p265 = scmp.lt.s32.totalorder %s256, 100
      %p266 = pnand %p264, %p265
      %p267 = pneg %p266
    $region8: #{smooth_topk_gate.1} parent=1 // loop_header_branch
      %269 = sbr.rel (%p266) target = $region12
    $region9: #{smooth_topk_gate.1} parent=1 // loop_body
      %v270 = vsub.f32 %v9, %v258
      %v271 = vsub.f32 %v10, %v259
      %v272 = vsub.f32 %v11, %v260
      %v273 = vmul.f32 %v270, 50.0
      %v274 = vmul.f32 %v271, 50.0
      %v275 = vmul.f32 %v272, 50.0
      %v276 = vtanh.pop %v273
      %v277 = vtanh.pop %v274
      %v278 = vtanh.pop %v275
      %v279 = vrot.slane %v276, 4
      %v280 = vadd.f32 %v276, %v279
      %v281 = vrot.slane %v280, 2
      %v282 = vadd.f32 %v280, %v281
      %v283 = vrot.slane %v282, 1
      %v284 = vadd.f32 %v282, %v283
      %v285 = vrot.slane %v277, 4
      %v286 = vadd.f32 %v277, %v285
      %v287 = vrot.slane %v286, 2
      %v288 = vadd.f32 %v286, %v287
      %v289 = vrot.slane %v288, 1
      %v290 = vadd.f32 %v288, %v289
      %v291 = vrot.slane %v278, 4
      %v292 = vadd.f32 %v278, %v291
      %v293 = vrot.slane %v292, 2
      %v294 = vadd.f32 %v292, %v293
      %v295 = vrot.slane %v294, 1
      %v296 = vadd.f32 %v294, %v295
      %v297 = vmul.f32 %v284, 0.5
      %v298 = vmul.f32 %v290, 0.5
      %v299 = vmul.f32 %v296, 0.5
      %v300 = vadd.f32 %v297, 2.0
      %v301 = vadd.f32 %v298, 2.0
      %v302 = vadd.f32 %v299, 2.0
      %vm303 = vcmask 1040384
      %v304 = vsel %vm303, %v300, 0.0
      %v305 = vsel %vm303, %v301, 0.0
      %v306 = vadd.f32 %v304, %v305
      %v307 = vsel %vm303, %v302, 0.0
      %v308 = vadd.f32 %v306, %v307
      %309 = vadd.xlane.f32.xlu0 %v308
      %v310 = vpop.xlane.xlu0 %309
      %v311 = vrot.slane %v310, 4
      %v312 = vadd.f32 %v310, %v311
      %v313 = vrot.slane %v312, 2
      %v314 = vadd.f32 %v312, %v313
      %v315 = vrot.slane %v314, 1
      %v316 = vadd.f32 %v314, %v315
      %s317 = vtos %v316
      %v318 = vrcp.pop 384.0
      %v319 = vmul.f32 384.0, %v318
      %v320 = vsub.f32 1.0, %v319
      %v321 = vmul.f32 %v318, %v320
      %v322 = vadd.f32 %v318, %v321
      %vm323 = vweird.f32 %v318
      %v324 = vsel %vm323, %v318, %v322
      %s325 = vtos %v324
      %s326 = smul.f32 %s317, %s325
      %p327 = scmp.lt.f32.partialorder %s326, 0.001
      %p328 = por %p257, %p327
      %v329 = vmul.f32 %v276, %v276
      %v330 = vmul.f32 %v277, %v277
      %v331 = vmul.f32 %v278, %v278
      %v332 = vrot.slane %v329, 4
      %v333 = vadd.f32 %v329, %v332
      %v334 = vrot.slane %v333, 2
      %v335 = vadd.f32 %v333, %v334
      %v336 = vrot.slane %v335, 1
      %v337 = vadd.f32 %v335, %v336
      %v338 = vrot.slane %v330, 4
      %v339 = vadd.f32 %v330, %v338
      %v340 = vrot.slane %v339, 2
      %v341 = vadd.f32 %v339, %v340
      %v342 = vrot.slane %v341, 1
      %v343 = vadd.f32 %v341, %v342
      %v344 = vrot.slane %v331, 4
      %v345 = vadd.f32 %v331, %v344
      %v346 = vrot.slane %v345, 2
      %v347 = vadd.f32 %v345, %v346
      %v348 = vrot.slane %v347, 1
      %v349 = vadd.f32 %v347, %v348
      %v350 = vsub.f32 8.0, %v337
      %v351 = vsub.f32 8.0, %v343
      %v352 = vsub.f32 8.0, %v349
      %v353 = vmax.f32 %v350, 4e-06
      %v354 = vmax.f32 %v351, 4e-06
      %v355 = vmax.f32 %v352, 4e-06
      %v356 = vmul.f32 %v300, 0.04
      %v357 = vmul.f32 %v301, 0.04
      %v358 = vmul.f32 %v302, 0.04
      %v359 = vrcp.pop %v353
      %v360 = vrcp.pop %v354
      %v361 = vrcp.pop %v355
      %v362 = vmul.f32 %v356, %v359
      %v363 = vmul.f32 %v357, %v360
      %v364 = vmul.f32 %v358, %v361
      %v365 = vadd.f32 %v258, %v362
      %v366 = vadd.f32 %v259, %v363
      %v367 = vadd.f32 %v260, %v364
      %s368 = scalar_select %p328, 1, 0
      %v369 = vstv %s368
      %vm370 = vcmp.eq.s32.totalorder %v369, 1
      %v371 = vsel %vm370, %v258, %v365
      %v372 = vsel %vm370, %v259, %v366
      %v373 = vsel %vm370, %v260, %v367
      %v374 = vsub.f32 %v9, %v371
      %v375 = vsub.f32 %v10, %v372
      %v376 = vsub.f32 %v11, %v373
      %v377 = vmul.f32 %v374, 50.0
      %v378 = vmul.f32 %v375, 50.0
      %v379 = vmul.f32 %v376, 50.0
      %v380 = vtanh.pop %v377
      %v381 = vtanh.pop %v378
      %v382 = vtanh.pop %v379
      %v383 = vrot.slane %v380, 4
      %v384 = vadd.f32 %v380, %v383
      %v385 = vrot.slane %v384, 2
      %v386 = vadd.f32 %v384, %v385
      %v387 = vrot.slane %v386, 1
      %v388 = vadd.f32 %v386, %v387
      %v389 = vrot.slane %v381, 4
      %v390 = vadd.f32 %v381, %v389
      %v391 = vrot.slane %v390, 2
      %v392 = vadd.f32 %v390, %v391
      %v393 = vrot.slane %v392, 1
      %v394 = vadd.f32 %v392, %v393
      %v395 = vrot.slane %v382, 4
      %v396 = vadd.f32 %v382, %v395
      %v397 = vrot.slane %v396, 2
      %v398 = vadd.f32 %v396, %v397
      %v399 = vrot.slane %v398, 1
      %v400 = vadd.f32 %v398, %v399
      %v401 = vmul.f32 %v388, 0.5
      %v402 = vmul.f32 %v394, 0.5
      %v403 = vmul.f32 %v400, 0.5
      %v404 = vadd.f32 %v401, 2.0
      %v405 = vadd.f32 %v402, 2.0
      %v406 = vadd.f32 %v403, 2.0
      %v407 = vsel %vm303, %v404, 0.0
      %v408 = vsel %vm303, %v405, 0.0
      %v409 = vadd.f32 %v407, %v408
      %v410 = vsel %vm303, %v406, 0.0
      %v411 = vadd.f32 %v409, %v410
      %412 = vadd.xlane.f32.xlu0 %v411
      %v413 = vpop.xlane.xlu0 %412
      %v414 = vrot.slane %v413, 4
      %v415 = vadd.f32 %v413, %v414
      %v416 = vrot.slane %v415, 2
      %v417 = vadd.f32 %v415, %v416
      %v418 = vrot.slane %v417, 1
      %v419 = vadd.f32 %v417, %v418
      %s420 = vtos %v419
      %v421 = vrcp.pop 384.0
      %v422 = vmul.f32 384.0, %v421
      %v423 = vsub.f32 1.0, %v422
      %v424 = vmul.f32 %v421, %v423
      %v425 = vadd.f32 %v421, %v424
      %vm426 = vweird.f32 %v421
      %v427 = vsel %vm426, %v421, %v425
      %s428 = vtos %v427
      %s429 = smul.f32 %s420, %s428
      %p430 = scmp.lt.f32.partialorder %s429, 0.001
      %p431 = por %p328, %p430
      %v432 = vmul.f32 %v380, %v380
      %v433 = vmul.f32 %v381, %v381
      %v434 = vmul.f32 %v382, %v382
      %v435 = vrot.slane %v432, 4
      %v436 = vadd.f32 %v432, %v435
      %v437 = vrot.slane %v436, 2
      %v438 = vadd.f32 %v436, %v437
      %v439 = vrot.slane %v438, 1
      %v440 = vadd.f32 %v438, %v439
      %v441 = vrot.slane %v433, 4
      %v442 = vadd.f32 %v433, %v441
      %v443 = vrot.slane %v442, 2
      %v444 = vadd.f32 %v442, %v443
      %v445 = vrot.slane %v444, 1
      %v446 = vadd.f32 %v444, %v445
      %v447 = vrot.slane %v434, 4
      %v448 = vadd.f32 %v434, %v447
      %v449 = vrot.slane %v448, 2
      %v450 = vadd.f32 %v448, %v449
      %v451 = vrot.slane %v450, 1
      %v452 = vadd.f32 %v450, %v451
      %v453 = vsub.f32 8.0, %v440
      %v454 = vsub.f32 8.0, %v446
      %v455 = vsub.f32 8.0, %v452
      %v456 = vmax.f32 %v453, 4e-06
      %v457 = vmax.f32 %v454, 4e-06
      %v458 = vmax.f32 %v455, 4e-06
      %v459 = vmul.f32 %v404, 0.04
      %v460 = vmul.f32 %v405, 0.04
      %v461 = vmul.f32 %v406, 0.04
      %v462 = vrcp.pop %v456
      %v463 = vrcp.pop %v457
      %v464 = vrcp.pop %v458
      %v465 = vmul.f32 %v459, %v462
      %v466 = vmul.f32 %v460, %v463
      %v467 = vmul.f32 %v461, %v464
      %v468 = vadd.f32 %v371, %v465
      %v469 = vadd.f32 %v372, %v466
      %v470 = vadd.f32 %v373, %v467
      %s471 = scalar_select %p431, 1, 0
      %v472 = vstv %s471
      %vm473 = vcmp.eq.s32.totalorder %v472, 1
      %v474 = vsel %vm473, %v371, %v468
      %v475 = vsel %vm473, %v372, %v469
      %v476 = vsel %vm473, %v373, %v470
      %v477 = vsub.f32 %v9, %v474
      %v478 = vsub.f32 %v10, %v475
      %v479 = vsub.f32 %v11, %v476
      %v480 = vmul.f32 %v477, 50.0
      %v481 = vmul.f32 %v478, 50.0
      %v482 = vmul.f32 %v479, 50.0
      %v483 = vtanh.pop %v480
      %v484 = vtanh.pop %v481
      %v485 = vtanh.pop %v482
      %v486 = vrot.slane %v483, 4
      %v487 = vadd.f32 %v483, %v486
      %v488 = vrot.slane %v487, 2
      %v489 = vadd.f32 %v487, %v488
      %v490 = vrot.slane %v489, 1
      %v491 = vadd.f32 %v489, %v490
      %v492 = vrot.slane %v484, 4
      %v493 = vadd.f32 %v484, %v492
      %v494 = vrot.slane %v493, 2
      %v495 = vadd.f32 %v493, %v494
      %v496 = vrot.slane %v495, 1
      %v497 = vadd.f32 %v495, %v496
      %v498 = vrot.slane %v485, 4
      %v499 = vadd.f32 %v485, %v498
      %v500 = vrot.slane %v499, 2
      %v501 = vadd.f32 %v499, %v500
      %v502 = vrot.slane %v501, 1
      %v503 = vadd.f32 %v501, %v502
      %v504 = vmul.f32 %v491, 0.5
      %v505 = vmul.f32 %v497, 0.5
      %v506 = vmul.f32 %v503, 0.5
      %v507 = vadd.f32 %v504, 2.0
      %v508 = vadd.f32 %v505, 2.0
      %v509 = vadd.f32 %v506, 2.0
      %v510 = vsel %vm303, %v507, 0.0
      %v511 = vsel %vm303, %v508, 0.0
      %v512 = vadd.f32 %v510, %v511
      %v513 = vsel %vm303, %v509, 0.0
      %v514 = vadd.f32 %v512, %v513
      %515 = vadd.xlane.f32.xlu0 %v514
      %v516 = vpop.xlane.xlu0 %515
      %v517 = vrot.slane %v516, 4
      %v518 = vadd.f32 %v516, %v517
      %v519 = vrot.slane %v518, 2
      %v520 = vadd.f32 %v518, %v519
      %v521 = vrot.slane %v520, 1
      %v522 = vadd.f32 %v520, %v521
      %s523 = vtos %v522
      %v524 = vrcp.pop 384.0
      %v525 = vmul.f32 384.0, %v524
      %v526 = vsub.f32 1.0, %v525
      %v527 = vmul.f32 %v524, %v526
      %v528 = vadd.f32 %v524, %v527
      %vm529 = vweird.f32 %v524
      %v530 = vsel %vm529, %v524, %v528
      %s531 = vtos %v530
      %s532 = smul.f32 %s523, %s531
      %p533 = scmp.lt.f32.partialorder %s532, 0.001
      %p534 = por %p431, %p533
      %v535 = vmul.f32 %v483, %v483
      %v536 = vmul.f32 %v484, %v484
      %v537 = vmul.f32 %v485, %v485
      %v538 = vrot.slane %v535, 4
      %v539 = vadd.f32 %v535, %v538
      %v540 = vrot.slane %v539, 2
      %v541 = vadd.f32 %v539, %v540
      %v542 = vrot.slane %v541, 1
      %v543 = vadd.f32 %v541, %v542
      %v544 = vrot.slane %v536, 4
      %v545 = vadd.f32 %v536, %v544
      %v546 = vrot.slane %v545, 2
      %v547 = vadd.f32 %v545, %v546
      %v548 = vrot.slane %v547, 1
      %v549 = vadd.f32 %v547, %v548
      %v550 = vrot.slane %v537, 4
      %v551 = vadd.f32 %v537, %v550
      %v552 = vrot.slane %v551, 2
      %v553 = vadd.f32 %v551, %v552
      %v554 = vrot.slane %v553, 1
      %v555 = vadd.f32 %v553, %v554
      %v556 = vsub.f32 8.0, %v543
      %v557 = vsub.f32 8.0, %v549
      %v558 = vsub.f32 8.0, %v555
      %v559 = vmax.f32 %v556, 4e-06
      %v560 = vmax.f32 %v557, 4e-06
      %v561 = vmax.f32 %v558, 4e-06
      %v562 = vmul.f32 %v507, 0.04
      %v563 = vmul.f32 %v508, 0.04
      %v564 = vmul.f32 %v509, 0.04
      %v565 = vrcp.pop %v559
      %v566 = vrcp.pop %v560
      %v567 = vrcp.pop %v561
      %v568 = vmul.f32 %v562, %v565
      %v569 = vmul.f32 %v563, %v566
      %v570 = vmul.f32 %v564, %v567
      %v571 = vadd.f32 %v474, %v568
      %v572 = vadd.f32 %v475, %v569
      %v573 = vadd.f32 %v476, %v570
      %s574 = scalar_select %p534, 1, 0
      %v575 = vstv %s574
      %vm576 = vcmp.eq.s32.totalorder %v575, 1
      %v577 = vsel %vm576, %v474, %v571
      %v578 = vsel %vm576, %v475, %v572
      %v579 = vsel %vm576, %v476, %v573
      %v580 = vsub.f32 %v9, %v577
      %v581 = vsub.f32 %v10, %v578
      %v582 = vsub.f32 %v11, %v579
      %v583 = vmul.f32 %v580, 50.0
      %v584 = vmul.f32 %v581, 50.0
      %v585 = vmul.f32 %v582, 50.0
      %v586 = vtanh.pop %v583
      %v587 = vtanh.pop %v584
      %v588 = vtanh.pop %v585
      %v589 = vrot.slane %v586, 4
      %v590 = vadd.f32 %v586, %v589
      %v591 = vrot.slane %v590, 2
      %v592 = vadd.f32 %v590, %v591
      %v593 = vrot.slane %v592, 1
      %v594 = vadd.f32 %v592, %v593
      %v595 = vrot.slane %v587, 4
      %v596 = vadd.f32 %v587, %v595
      %v597 = vrot.slane %v596, 2
      %v598 = vadd.f32 %v596, %v597
      %v599 = vrot.slane %v598, 1
      %v600 = vadd.f32 %v598, %v599
      %v601 = vrot.slane %v588, 4
      %v602 = vadd.f32 %v588, %v601
      %v603 = vrot.slane %v602, 2
      %v604 = vadd.f32 %v602, %v603
      %v605 = vrot.slane %v604, 1
      %v606 = vadd.f32 %v604, %v605
      %v607 = vmul.f32 %v594, 0.5
      %v608 = vmul.f32 %v600, 0.5
      %v609 = vmul.f32 %v606, 0.5
      %v610 = vadd.f32 %v607, 2.0
      %v611 = vadd.f32 %v608, 2.0
      %v612 = vadd.f32 %v609, 2.0
      %v613 = vsel %vm303, %v610, 0.0
      %v614 = vsel %vm303, %v611, 0.0
      %v615 = vadd.f32 %v613, %v614
      %v616 = vsel %vm303, %v612, 0.0
      %v617 = vadd.f32 %v615, %v616
      %618 = vadd.xlane.f32.xlu0 %v617
      %v619 = vpop.xlane.xlu0 %618
      %v620 = vrot.slane %v619, 4
      %v621 = vadd.f32 %v619, %v620
      %v622 = vrot.slane %v621, 2
      %v623 = vadd.f32 %v621, %v622
      %v624 = vrot.slane %v623, 1
      %v625 = vadd.f32 %v623, %v624
      %s626 = vtos %v625
      %v627 = vrcp.pop 384.0
      %v628 = vmul.f32 384.0, %v627
      %v629 = vsub.f32 1.0, %v628
      %v630 = vmul.f32 %v627, %v629
      %v631 = vadd.f32 %v627, %v630
      %vm632 = vweird.f32 %v627
      %v633 = vsel %vm632, %v627, %v631
      %s634 = vtos %v633
      %s635 = smul.f32 %s626, %s634
      %p636 = scmp.lt.f32.partialorder %s635, 0.001
      %p637 = por %p534, %p636
      %v638 = vmul.f32 %v586, %v586
      %v639 = vmul.f32 %v587, %v587
      %v640 = vmul.f32 %v588, %v588
      %v641 = vrot.slane %v638, 4
      %v642 = vadd.f32 %v638, %v641
      %v643 = vrot.slane %v642, 2
      %v644 = vadd.f32 %v642, %v643
      %v645 = vrot.slane %v644, 1
      %v646 = vadd.f32 %v644, %v645
      %v647 = vrot.slane %v639, 4
      %v648 = vadd.f32 %v639, %v647
      %v649 = vrot.slane %v648, 2
      %v650 = vadd.f32 %v648, %v649
      %v651 = vrot.slane %v650, 1
      %v652 = vadd.f32 %v650, %v651
      %v653 = vrot.slane %v640, 4
      %v654 = vadd.f32 %v640, %v653
      %v655 = vrot.slane %v654, 2
      %v656 = vadd.f32 %v654, %v655
      %v657 = vrot.slane %v656, 1
      %v658 = vadd.f32 %v656, %v657
      %v659 = vsub.f32 8.0, %v646
      %v660 = vsub.f32 8.0, %v652
      %v661 = vsub.f32 8.0, %v658
      %v662 = vmax.f32 %v659, 4e-06
      %v663 = vmax.f32 %v660, 4e-06
      %v664 = vmax.f32 %v661, 4e-06
      %v665 = vmul.f32 %v610, 0.04
      %v666 = vmul.f32 %v611, 0.04
      %v667 = vmul.f32 %v612, 0.04
      %v668 = vrcp.pop %v662
      %v669 = vrcp.pop %v663
      %v670 = vrcp.pop %v664
      %v671 = vmul.f32 %v665, %v668
      %v672 = vmul.f32 %v666, %v669
      %v673 = vmul.f32 %v667, %v670
      %v674 = vadd.f32 %v577, %v671
      %v675 = vadd.f32 %v578, %v672
      %v676 = vadd.f32 %v579, %v673
      %s677 = scalar_select %p637, 1, 0
      %v678 = vstv %s677
      %vm679 = vcmp.eq.s32.totalorder %v678, 1
      %v680 = vsel %vm679, %v577, %v674
      %v681 = vsel %vm679, %v578, %v675
      %v682 = vsel %vm679, %v579, %v676
      %s683 = sadd.s32 %s256, 4
    $region10: #{smooth_topk_gate.1} parent=1 // loop_footer
      _
    $region11: #{smooth_topk_gate.1} parent=1 // loop_footer_branch
      %255 = sbr.rel target = $region7
    $region12: #{smooth_topk_gate.1} parent=1 // loop_exit
      _
    // Predicated region
    $region13: #{smooth_topk_gate.1} parent=1 // pred_check
      %p684 = pneg %p257
    $region14: #{smooth_topk_gate.1} parent=1 // pred_check_branch
      %686 = sbr.rel (%p684) target = $region16
    $region15: #{smooth_topk_gate.1} parent=1 // pred_region
      %v687 = vadd.f32 %v261, 1.0
      %v688 = vadd.f32 %v262, 1.0
      %v689 = vadd.f32 %v263, 1.0
      %v690 = vmul.f32 %v687, 0.5
      %v691 = vmul.f32 %v688, 0.5
      %v692 = vmul.f32 %v689, 0.5
      %693 = vst [vmem:[#allocation2] sm:$0xff] %v690
      %694 = vst [vmem:[#allocation2 + $0x8] sm:$0xff] %v691
      %695 = vst [vmem:[#allocation2 + $0x10] sm:$0xff] %v692
    $region16: #{smooth_topk_gate.1} parent=1 // pred_fallthru
      _
    %p696 = pneg %p257
    // Predicated region
    $region17: #{smooth_topk_gate.1} parent=1 // pred_check
      _
    $region18: #{smooth_topk_gate.1} parent=1 // pred_check_branch
      %698 = sbr.rel (%p257) target = $region20
    $region19: #{smooth_topk_gate.1} parent=1 // pred_region
      %v699 = vsub.f32 %v9, %v258
      %v700 = vsub.f32 %v10, %v259
      %v701 = vsub.f32 %v11, %v260
      %v702 = vmul.f32 %v699, 50.0
      %v703 = vmul.f32 %v700, 50.0
      %v704 = vmul.f32 %v701, 50.0
      %v705 = vtanh.pop %v702
      %v706 = vtanh.pop %v703
      %v707 = vtanh.pop %v704
      %v708 = vadd.f32 %v705, 1.0
      %v709 = vadd.f32 %v706, 1.0
      %v710 = vadd.f32 %v707, 1.0
      %v711 = vmul.f32 %v708, 0.5
      %v712 = vmul.f32 %v709, 0.5
      %v713 = vmul.f32 %v710, 0.5
      %714 = vst [vmem:[#allocation2] sm:$0xff] %v711
      %715 = vst [vmem:[#allocation2 + $0x8] sm:$0xff] %v712
      %716 = vst [vmem:[#allocation2 + $0x10] sm:$0xff] %v713
    $region20: #{smooth_topk_gate.1} parent=1 // pred_fallthru
      _
    // Predicated region
    $region21: #{smooth_topk_gate.1} parent=1 // pred_check
      _
    $region22: #{smooth_topk_gate.1} parent=1 // pred_check_branch
      %718 = sbr.rel (0) target = $region24
    $region23: #{smooth_topk_gate.1} parent=1 // pred_region
      %720 = vsyncadd [#allocation3], 0
      %s722 = sshll.u32 [#allocation2], 4
      %s723 = int_to_ptr.vmem [resolvable:$true] %s722
      %s724 = sshll.u32 %s1, 4
      %s725 = int_to_ptr.hbm [resolvable:$true] %s724
      %727 = dma.vmem_to_hbm [thread:$0]  %s723, 384, %s725, [#allocation3]
    $region24: #{smooth_topk_gate.1} parent=1 // pred_fallthru
      _
    // Predicated region
    $region25: #{smooth_topk_gate.1} parent=1 // pred_check
      _
    $region26: #{smooth_topk_gate.1} parent=1 // pred_check_branch
      %729 = sbr.rel (0) target = $region28
    $region27: #{smooth_topk_gate.1} parent=1 // pred_region
      %731 = dma.done [#allocation3], 384
    $region28: #{smooth_topk_gate.1} parent=1 // pred_fallthru
      _
    %732 = vsyncpa [#allocation3], 1

</llo_original>
